<compile_context>
chip_gen: v6e
topology: v6e:2x2x1
jax: 0.10.0
libtpu: 0.0.40
codegen_flags: <defaults>
</compile_context>

<pallas_src>
import functools

import jax
import jax.numpy as jnp
from jax.experimental import pallas as pl
from jax.experimental.pallas import tpu as pltpu


def conv1d_lstm_cell_kernel(xcol_ref, c_ref, w_ref, out_ref, *, hidden_dim):
    """One chunk of Mt rows of the flattened (B*L) dimension per grid step.

    xcol_ref : (Mt, K*Cc)  im2col'd [x | h] windows, compute dtype (bf16/f32)
    c_ref    : (Mt, H)     current cell state, float32
    w_ref    : (K*Cc, 4H)  fused conv weight, gate columns ordered [i, f, o, g]
    out_ref  : (Mt, 2H)    packed [h_next | c_next], float32
    """
    Hd = hidden_dim

    # Single tall MXU contraction per grid step: the conv taps are folded into
    # the K*Cc contraction dimension by the wrapper-side im2col.
    gates = jnp.dot(xcol_ref[...], w_ref[...],
                    preferred_element_type=jnp.float32)

    # Gate columns were reordered to [i, f, o, g] in the wrapper, so the three
    # sigmoid gates are one contiguous lane-dense slab and g gets the only tanh.
    sig = jax.nn.sigmoid(gates[:, :3 * Hd])
    i_g = sig[:, 0 * Hd:1 * Hd]
    f_g = sig[:, 1 * Hd:2 * Hd]
    o_g = sig[:, 2 * Hd:3 * Hd]
    g_g = jnp.tanh(gates[:, 3 * Hd:4 * Hd])

    c_cur = c_ref[...]                             # float32
    c_next = f_g * c_cur + i_g * g_g
    h_next = o_g * jnp.tanh(c_next)

    # One full-width packed writeback (lane-dense whenever 2H >= 128).
    out_ref[...] = jnp.concatenate([h_next, c_next],
                                   axis=-1).astype(out_ref.dtype)


def conv1d_lstm_cell(x, h_cur, c_cur, w_x, w_h, *, kernel_size,
                     compute_dtype=jnp.bfloat16, target_rows=2048,
                     vmem_budget_bytes=32 << 20):
    """Pallas Conv1dLSTMCell forward.

    x      : (B, C_in, L)   PyTorch NCW layout
    h_cur  : (B, H, L)
    c_cur  : (B, H, L)
    w_x    : (4H, C_in, K)  PyTorch Conv1d weight layout (Cout, Cin, K)
    w_h    : (4H, H, K)
    compute_dtype : dtype of the MXU matmul operands / xh DMA (bf16 default
                    for v6e/v7x; gate math is always float32).
    returns (h_next, c_next) in (B, H, L); h_next in x.dtype, c_next in float32.
    """
    B, C_in, L = x.shape
    Hd = h_cur.shape[1]
    K = kernel_size
    if K % 2 != 1:
        # padding=(K-1)//2 only reproduces the PyTorch output length for odd K.
        raise ValueError("conv1d_lstm_cell requires an odd kernel_size")
    pad = (K - 1) // 2
    Cc = C_in + Hd
    KCc = K * Cc

    # --- glue: layout + padding + im2col (cheap XLA ops) -------------------
    x_t = jnp.transpose(x, (0, 2, 1))                 # (B, L, C_in)
    h_t = jnp.transpose(h_cur, (0, 2, 1))             # (B, L, H)
    c_t = jnp.transpose(c_cur, (0, 2, 1)).reshape(B * L, Hd).astype(jnp.float32)

    x_pad = jnp.pad(x_t, ((0, 0), (pad, pad), (0, 0)), mode='wrap')   # circular
    h_pad = jnp.pad(h_t, ((0, 0), (pad, pad), (0, 0)), mode='edge')   # replicate
    xh_pad = jnp.concatenate([x_pad, h_pad], axis=-1)                 # (B, Lp, Cc)

    # im2col: row (b*L + l) holds the K taps [xh_pad[b, l+t, :] for t in 0..K-1]
    # flattened along channels -> (B*L, K*Cc), cast to the MXU/DMA dtype.
    xcol = jnp.concatenate([xh_pad[:, t:t + L, :] for t in range(K)], axis=-1)
    xcol = xcol.reshape(B * L, KCc).astype(compute_dtype)

    # Fuse the two conv weights: (4H,C_in,K) & (4H,H,K) -> (K, Cc, 4H), reorder
    # gate columns from torch's [i, f, g, o] to [i, f, o, g] (sigmoid gates
    # contiguous), then flatten the taps into the contraction dim -> (K*Cc, 4H).
    wx_t = jnp.transpose(w_x, (2, 1, 0))              # (K, C_in, 4H)
    wh_t = jnp.transpose(w_h, (2, 1, 0))              # (K, H, 4H)
    w_cat = jnp.concatenate([wx_t, wh_t], axis=1)     # (K, Cc, 4H)
    w_cat = jnp.concatenate([w_cat[..., 0 * Hd:1 * Hd],   # i
                             w_cat[..., 1 * Hd:2 * Hd],   # f
                             w_cat[..., 3 * Hd:4 * Hd],   # o
                             w_cat[..., 2 * Hd:3 * Hd]],  # g
                            axis=-1)
    w_col = w_cat.reshape(KCc, 4 * Hd).astype(compute_dtype)

    # --- row chunking: Mt rows of the flattened (B*L) dim per grid step ----
    M_total = B * L
    row_align = 8
    cb = jnp.dtype(compute_dtype).itemsize
    per_row_bytes = KCc * cb + Hd * 4 + 2 * Hd * 4          # xcol + c + out
    w_bytes = KCc * 4 * Hd * cb
    # Double-buffered blocks + (conservatively double-buffered) weight must fit
    # the VMEM budget.
    max_rows = max(row_align,
                   (vmem_budget_bytes - 2 * w_bytes) // (2 * per_row_bytes))
    Mt = int(max(row_align, min(target_rows, max_rows)))
    # Guarantee >= 2 grid steps whenever possible: DMA/compute overlap and both
    # v7x TensorCores get work even for tiny batches.
    if Mt >= M_total:
        Mt = max(row_align, -(-M_total // 2))
    # MXU-friendly row alignment (256-wide passes on v6e/v7x, 128 on v5e).
    if Mt >= 512:
        align = 256
    elif Mt >= 128:
        align = 128
    else:
        align = row_align
    Mt = -(-Mt // align) * align
    num_steps = -(-M_total // Mt)
    M_pad = num_steps * Mt

    if M_pad > M_total:                               # pad rows; slice outputs
        xcol = jnp.pad(xcol, ((0, M_pad - M_total), (0, 0)))
        c_t = jnp.pad(c_t, ((0, M_pad - M_total), (0, 0)))

    vmem_usage = 2 * (Mt * per_row_bytes + w_bytes)
    vmem_limit = int(min(64 << 20, max(vmem_usage + (4 << 20), 16 << 20)))

    kern = functools.partial(conv1d_lstm_cell_kernel, hidden_dim=Hd)

    packed = pl.pallas_call(
        kern,
        out_shape=jax.ShapeDtypeStruct((M_pad, 2 * Hd), jnp.float32),
        grid_spec=pltpu.PrefetchScalarGridSpec(
            num_scalar_prefetch=0,
            grid=(num_steps,),
            in_specs=[
                pl.BlockSpec((Mt, KCc), lambda i: (i, 0)),
                pl.BlockSpec((Mt, Hd), lambda i: (i, 0)),
                # Constant-index weight block (tiny, block index never changes).
                pl.BlockSpec((KCc, 4 * Hd), lambda i: (0, 0)),
            ],
            out_specs=pl.BlockSpec((Mt, 2 * Hd), lambda i: (i, 0)),
        ),
        compiler_params=pltpu.CompilerParams(
            dimension_semantics=("parallel",),
            vmem_limit_bytes=vmem_limit),
    )(xcol, c_t, w_col)

    packed = packed[:M_total]
    h_next = packed[:, :Hd].reshape(B, L, Hd).astype(x.dtype)
    # c_next stays float32 regardless of input dtype (cell-state precision).
    c_next = packed[:, Hd:].reshape(B, L, Hd)
    return (jnp.transpose(h_next, (0, 2, 1)),
            jnp.transpose(c_next, (0, 2, 1)))


def conv1d_lstm_cell_ref(x, h_cur, c_cur, w_x, w_h, kernel_size,
                         compute_dtype=jnp.float32):
    """Pure-JAX reference mirroring the PyTorch forward (for verification).

    compute_dtype quantizes the conv operands the same way the kernel does
    (f32 accumulation either way) so the bf16 fast path can be checked tightly.
    """
    pad = (kernel_size - 1) // 2
    cd = compute_dtype
    x_pad = jnp.pad(x, ((0, 0), (0, 0), (pad, pad)), mode='wrap').astype(cd)
    h_pad = jnp.pad(h_cur, ((0, 0), (0, 0), (pad, pad)), mode='edge').astype(cd)
    dn = ('NCH', 'OIH', 'NCH')
    x_conv = jax.lax.conv_general_dilated(
        x_pad, w_x.astype(cd), (1,), 'VALID', dimension_numbers=dn,
        preferred_element_type=jnp.float32)
    h_conv = jax.lax.conv_general_dilated(
        h_pad, w_h.astype(cd), (1,), 'VALID', dimension_numbers=dn,
        preferred_element_type=jnp.float32)
    x_i, x_f, x_g, x_o = jnp.split(x_conv, 4, axis=1)
    h_i, h_f, h_g, h_o = jnp.split(h_conv, 4, axis=1)
    f = jax.nn.sigmoid(x_f + h_f)
    i = jax.nn.sigmoid(x_i + h_i)
    g = jnp.tanh(x_g + h_g)
    c_next = f * c_cur.astype(jnp.float32) + i * g
    o = jax.nn.sigmoid(x_o + h_o)
    h_next = o * jnp.tanh(c_next)
    return h_next, c_next


if __name__ == "__main__":
    # Small shapes consistent with the module: Conv1d operates on (B, C, L).
    B, C_in, Hd, L, K = 2, 4, 32, 16, 3

    key = jax.random.PRNGKey(0)
    k1, k2, k3, k4, k5 = jax.random.split(key, 5)

    x = jax.random.normal(k1, (B, C_in, L), jnp.float32)
    h = jax.random.normal(k2, (B, Hd, L), jnp.float32)
    c = jax.random.normal(k3, (B, Hd, L), jnp.float32)

    # Deterministic kaiming-normal-style init (std = sqrt(2 / fan_in)).
    w_x = jax.random.normal(k4, (4 * Hd, C_in, K), jnp.float32) * jnp.sqrt(
        2.0 / (C_in * K))
    w_h = jax.random.normal(k5, (4 * Hd, Hd, K), jnp.float32) * jnp.sqrt(
        2.0 / (Hd * K))

    h_ref32, c_ref32 = conv1d_lstm_cell_ref(x, h, c, w_x, w_h, K,
                                            compute_dtype=jnp.float32)

    # 1) float32 MXU path — faithful to the module, tight check.
    h32, c32 = conv1d_lstm_cell(x, h, c, w_x, w_h, kernel_size=K,
                                compute_dtype=jnp.float32)
    jax.block_until_ready((h32, c32))
    assert jnp.allclose(h32, h_ref32, atol=1e-4, rtol=1e-4)
    assert jnp.allclose(c32, c_ref32, atol=1e-4, rtol=1e-4)

    # 2) bf16 MXU/DMA fast path (default) — compare against a bf16-quantized
    #    reference (tight) and the exact f32 reference (loose).
    hbf, cbf = conv1d_lstm_cell(x, h, c, w_x, w_h, kernel_size=K)
    jax.block_until_ready((hbf, cbf))
    h_refbf, c_refbf = conv1d_lstm_cell_ref(x, h, c, w_x, w_h, K,
                                            compute_dtype=jnp.bfloat16)
    assert jnp.allclose(hbf, h_refbf, atol=2e-3, rtol=2e-3)
    assert jnp.allclose(cbf, c_refbf, atol=2e-3, rtol=2e-3)
    assert jnp.allclose(hbf, h_ref32, atol=6e-2, rtol=6e-2)
    assert jnp.allclose(cbf, c_ref32, atol=6e-2, rtol=6e-2)

    print("KERNEL_OK")
</pallas_src>

<mosaic_0001>
module attributes {stable_mosaic.version = 11 : i64} {
  func.func @conv1d_lstm_cell_kernel(%arg0: i32, %arg1: memref<16x108xf32, #tpu.memory_space<vmem>>, %arg2: memref<16x32xf32, #tpu.memory_space<vmem>>, %arg3: memref<108x128xf32, #tpu.memory_space<vmem>>, %arg4: memref<16x64xf32, #tpu.memory_space<vmem>>) attributes {dimension_semantics = [#tpu.dimension_semantics<parallel>], iteration_bounds = array<i64: 2>, scalar_prefetch = 0 : i64, scratch_operands = 0 : i64, tpu.core_type = #tpu.core_type<tc>, window_params = [{transform_indices = @transform_0, window_bounds = array<i64: 16, 108>}, {transform_indices = @transform_1, window_bounds = array<i64: 16, 32>}, {pipeline_mode = #tpu.pipeline_mode<synchronous>, transform_indices = @transform_2, window_bounds = array<i64: 108, 128>}, {transform_indices = @transform_3, window_bounds = array<i64: 16, 64>}]} {
    %c0 = arith.constant 0 : index
    %c0_0 = arith.constant 0 : index
    %0 = vector.load %arg1[%c0, %c0_0] : memref<16x108xf32, #tpu.memory_space<vmem>>, vector<16x108xf32>
    %c0_1 = arith.constant 0 : index
    %c0_2 = arith.constant 0 : index
    %1 = vector.load %arg3[%c0_1, %c0_2] : memref<108x128xf32, #tpu.memory_space<vmem>>, vector<108x128xf32>
    %cst = arith.constant dense<0.000000e+00> : vector<16x128xf32>
    %2 = tpu.matmul %0, %1, %cst {dimension_numbers = #tpu.dot_dimension_numbers<[1], [0], [0], [1], [0, 0, 1, 1], [], []>} : vector<16x108xf32>, vector<108x128xf32>, vector<16x128xf32> -> vector<16x128xf32>
    %3 = vector.extract_strided_slice %2 {offsets = [0, 0], sizes = [16, 96], strides = [1, 1]} : vector<16x128xf32> to vector<16x96xf32>
    %4 = arith.negf %3 : vector<16x96xf32>
    %5 = math.exp %4 : vector<16x96xf32>
    %cst_3 = arith.constant 1.000000e+00 : f32
    %6 = vector.broadcast %cst_3 : f32 to vector<16x96xf32>
    %7 = arith.addf %6, %5 : vector<16x96xf32>
    %8 = arith.divf %6, %7 : vector<16x96xf32>
    %9 = vector.extract_strided_slice %8 {offsets = [0, 0], sizes = [16, 32], strides = [1, 1]} : vector<16x96xf32> to vector<16x32xf32>
    %10 = vector.extract_strided_slice %8 {offsets = [0, 32], sizes = [16, 32], strides = [1, 1]} : vector<16x96xf32> to vector<16x32xf32>
    %11 = vector.extract_strided_slice %8 {offsets = [0, 64], sizes = [16, 32], strides = [1, 1]} : vector<16x96xf32> to vector<16x32xf32>
    %12 = vector.extract_strided_slice %2 {offsets = [0, 96], sizes = [16, 32], strides = [1, 1]} : vector<16x128xf32> to vector<16x32xf32>
    %13 = math.tanh %12 : vector<16x32xf32>
    %c0_4 = arith.constant 0 : index
    %c0_5 = arith.constant 0 : index
    %14 = vector.load %arg2[%c0_4, %c0_5] : memref<16x32xf32, #tpu.memory_space<vmem>>, vector<16x32xf32>
    %15 = arith.mulf %10, %14 : vector<16x32xf32>
    %16 = arith.mulf %9, %13 : vector<16x32xf32>
    %17 = arith.addf %15, %16 : vector<16x32xf32>
    %18 = math.tanh %17 : vector<16x32xf32>
    %19 = arith.mulf %11, %18 : vector<16x32xf32>
    %20 = tpu.concatenate %19, %17 in 1 : vector<16x32xf32>, vector<16x32xf32> -> vector<16x64xf32>
    %c0_6 = arith.constant 0 : index
    %c0_7 = arith.constant 0 : index
    %21 = vector.load %arg4[%c0_6, %c0_7] : memref<16x64xf32, #tpu.memory_space<vmem>>, vector<16x64xf32>
    tpu.vector_store %arg4[%c0_6, %c0_7], %20 {strides = array<i32>} : memref<16x64xf32, #tpu.memory_space<vmem>>, vector<16x64xf32>,
    return
  }
  func.func @transform_0(%arg0: i32) -> (i32, i32) {
    %c0_i32 = arith.constant 0 : i32
    %c0_i32_0 = arith.constant 0 : i32
    return %arg0, %c0_i32 : i32, i32
  }
  func.func @transform_1(%arg0: i32) -> (i32, i32) {
    %c0_i32 = arith.constant 0 : i32
    %c0_i32_0 = arith.constant 0 : i32
    return %arg0, %c0_i32 : i32, i32
  }
  func.func @transform_2(%arg0: i32) -> (i32, i32) {
    %c0_i32 = arith.constant 0 : i32
    %c0_i32_0 = arith.constant 0 : i32
    %c0_i32_1 = arith.constant 0 : i32
    return %c0_i32, %c0_i32_0 : i32, i32
  }
  func.func @transform_3(%arg0: i32) -> (i32, i32) {
    %c0_i32 = arith.constant 0 : i32
    %c0_i32_0 = arith.constant 0 : i32
    return %arg0, %c0_i32 : i32, i32
  }
}

</mosaic_0001>

<llo_original>
// kernel: tpu_custom_call.1
$region0: #{tpu_custom_call.1}
  #allocation0 [shape = 'u32[]', space=smem, size = 0x4, offset = 0x4, fixed_abs, tag = 'smem constant byte address 0x4 - core index']
  #allocation1 [shape = 'u32[144,128]{1,0:T(1,128)}', space=vmem, size = 0x12000, scoped, tag = 'internal scratch']
  %s0 = inlined_call_operand.hbm [shape: f32[32,108], index: 0, kind: input, shape index: {}]
  %s1 = inlined_call_operand.hbm [shape: f32[32,32], index: 1, kind: input, shape index: {}]
  %s2 = inlined_call_operand.hbm [shape: f32[108,128], index: 2, kind: input, shape index: {}]
  %s3 = inlined_call_operand.hbm [shape: f32[32,64], index: 3, kind: output, shape index: {}]
  %s4 = sld [smem:[#allocation0]]
  $region57: #{tpu_custom_call.1} parent=0
    _
  %s6 = ssub.s32 1, %s4
  %s7 = scalar_select 0, %s6, %s4
  $region1: #{tpu_custom_call.1} parent=0
    #allocation2 [shape = 'u8[16384]{0}', space=vmem, size = 0x4000, scoped, tag = 'input window, operand 0']
    #allocation3 [shape = 's32[2]{0}', space=sflag, size = 0x8, scoped, tag = 'scoped memory for tpu_custom_call.1']
    #allocation4 [shape = 's32[2]{0}', space=sflag, size = 0x8, scoped, tag = 'scoped memory for tpu_custom_call.1']
    #allocation5 [shape = 'u8[16384]{0}', space=vmem, size = 0x4000, scoped, tag = 'input window, operand 1']
    #allocation6 [shape = 's32[2]{0}', space=sflag, size = 0x8, scoped, tag = 'scoped memory for tpu_custom_call.1']
    #allocation7 [shape = 'u8[57344]{0}', space=vmem, size = 0xe000, scoped, tag = 'input window, operand 2, single buffered']
    #allocation8 [shape = 'u8[16384]{0}', space=vmem, size = 0x4000, scoped, tag = 'output window, operand 0']
    %8 = vsyncpa [#allocation3], 0
    %s9 = scalar_lea.sflag [#allocation3], 1
    %10 = vsyncpa %s9, 0
    %11 = vsyncpa [#allocation6], 0
    %s12 = scalar_lea.sflag [#allocation6], 1
    %13 = vsyncpa %s12, 0
    %14 = vsyncpa [#allocation4], 0
    %s15 = scalar_lea.sflag [#allocation4], 1
    %16 = vsyncpa %s15, 0
    loop: start=0, step=1, limit=4
    $region2: #{tpu_custom_call.1} parent=1 // loop_pre_header
      _
    $region3: #{tpu_custom_call.1} parent=1 // loop_header
      %s18 = sphi 0, %s22
      %p19 = scmp.ge.s32.totalorder %s18, 4
      %s28 = sphi 0, %s30
      %s31 = sphi 0, %s28
      %s32 = sphi 0, %s31
      %s48 = sphi 0, %s32
      %s54 = sphi 0, %s56
      %s57 = sphi 0, %s54
      %s58 = sphi 0, %s57
      %s74 = sphi 0, %s58
      %s78 = sphi 0, %s78
      %s80 = sphi 0, %s78
      %s81 = sphi 0, %s80
      %s95 = sphi 0, %s81
      %s101 = sphi 0, %s103
      %s104 = sphi 0, %s101
      %s105 = sphi 0, %s104
      %s121 = sphi 0, %s105
    $region4: #{tpu_custom_call.1} parent=1 // loop_header_branch
      %21 = sbr.rel (%p19) target = $region8
    $region5: #{tpu_custom_call.1} parent=1 // loop_body
      %s23 = ssub.s32 %s18, 1
      %s24 = ssub.s32 %s18, 2
      %s25 = sadd.s32 %s18, 1
      %s26 = ssub.s32 %s18, %s25
      %p27 = scmp.eq.s32.totalorder %s26, 0
      %s29 = sadd.s32 %s28, 1
      %s30 = scalar_select %p27, %s28, %s29
      %p33 = pneg %p27
      %p34 = scmp.eq.s32.totalorder %s18, 1
      %p35 = por %p33, %p34
      %p36 = scmp.ne.s32.totalorder %s28, %s31
      %p37 = scmp.eq.s32.totalorder %s18, 0
      %p38 = por %p36, %p37
      %p39 = scmp.ne.s32.totalorder %s28, %s31
      %p40 = scmp.eq.s32.totalorder %s23, 1
      %p41 = por %p39, %p40
      %p42 = scmp.ne.s32.totalorder %s31, %s32
      %p43 = scmp.eq.s32.totalorder %s23, 0
      %p44 = por %p42, %p43
      %p45 = scmp.ne.s32.totalorder %s31, %s32
      %p46 = scmp.eq.s32.totalorder %s24, 1
      %p47 = por %p45, %p46
      %p49 = scmp.ne.s32.totalorder %s32, %s48
      %p50 = scmp.eq.s32.totalorder %s24, 0
      %p51 = por %p49, %p50
      %s52 = ssub.s32 %s18, %s25
      %p53 = scmp.eq.s32.totalorder %s52, 0
      %s55 = sadd.s32 %s54, 1
      %s56 = scalar_select %p53, %s54, %s55
      %p59 = pneg %p53
      %p60 = scmp.eq.s32.totalorder %s18, 1
      %p61 = por %p59, %p60
      %p62 = scmp.ne.s32.totalorder %s54, %s57
      %p63 = scmp.eq.s32.totalorder %s18, 0
      %p64 = por %p62, %p63
      %p65 = scmp.ne.s32.totalorder %s54, %s57
      %p66 = scmp.eq.s32.totalorder %s23, 1
      %p67 = por %p65, %p66
      %p68 = scmp.ne.s32.totalorder %s57, %s58
      %p69 = scmp.eq.s32.totalorder %s23, 0
      %p70 = por %p68, %p69
      %p71 = scmp.ne.s32.totalorder %s57, %s58
      %p72 = scmp.eq.s32.totalorder %s24, 1
      %p73 = por %p71, %p72
      %p75 = scmp.ne.s32.totalorder %s58, %s74
      %p76 = scmp.eq.s32.totalorder %s24, 0
      %p77 = por %p75, %p76
      %s79 = sadd.s32 %s78, 1
      %p82 = scmp.eq.s32.totalorder %s18, 1
      %p83 = scmp.ne.s32.totalorder %s78, %s80
      %p84 = scmp.eq.s32.totalorder %s18, 0
      %p85 = por %p83, %p84
      %p86 = scmp.ne.s32.totalorder %s78, %s80
      %p87 = scmp.eq.s32.totalorder %s23, 1
      %p88 = por %p86, %p87
      %p89 = scmp.ne.s32.totalorder %s80, %s81
      %p90 = scmp.eq.s32.totalorder %s23, 0
      %p91 = por %p89, %p90
      %p92 = scmp.ne.s32.totalorder %s80, %s81
      %p93 = scmp.eq.s32.totalorder %s24, 1
      %p94 = por %p92, %p93
      %p96 = scmp.ne.s32.totalorder %s81, %s95
      %p97 = scmp.eq.s32.totalorder %s24, 0
      %p98 = por %p96, %p97
      %s99 = ssub.s32 %s18, %s25
      %p100 = scmp.eq.s32.totalorder %s99, 0
      %s102 = sadd.s32 %s101, 1
      %s103 = scalar_select %p100, %s101, %s102
      %p106 = pneg %p100
      %p107 = scmp.eq.s32.totalorder %s18, 1
      %p108 = por %p106, %p107
      %p109 = scmp.ne.s32.totalorder %s101, %s104
      %p110 = scmp.eq.s32.totalorder %s18, 0
      %p111 = por %p109, %p110
      %p112 = scmp.ne.s32.totalorder %s101, %s104
      %p113 = scmp.eq.s32.totalorder %s23, 1
      %p114 = por %p112, %p113
      %p115 = scmp.ne.s32.totalorder %s104, %s105
      %p116 = scmp.eq.s32.totalorder %s23, 0
      %p117 = por %p115, %p116
      %p118 = scmp.ne.s32.totalorder %s104, %s105
      %p119 = scmp.eq.s32.totalorder %s24, 1
      %p120 = por %p118, %p119
      %p122 = scmp.ne.s32.totalorder %s105, %s121
      %p123 = scmp.eq.s32.totalorder %s24, 0
      %p124 = por %p122, %p123
      %p125 = scmp.le.s32.totalorder 1, %s18
      %p126 = scmp.lt.s32.totalorder %s18, 3
      %p127 = pnand %p125, %p126
      %p128 = pneg %p127
      // Predicated region
      $region9: #{tpu_custom_call.1} parent=5 // pred_check
        _
      $region10: #{tpu_custom_call.1} parent=5 // pred_check_branch
        %130 = sbr.rel (%p127) target = $region12
      $region11: #{tpu_custom_call.1} parent=5 // pred_region
        %s131 = ssub.s32 %s18, 1
        // Predicated region
        $region13: #{tpu_custom_call.1} parent=11 // pred_check
          %p132 = pneg %p91
        $region14: #{tpu_custom_call.1} parent=11 // pred_check_branch
          %134 = sbr.rel (%p132) target = $region16
        $region15: #{tpu_custom_call.1} parent=11 // pred_region
          %s136 = ssub.s32 1792, 1792
          %137 = vsyncadd [#allocation6], %s136
          %s138 = sshll.u32 [#allocation7], 4
          %s139 = int_to_ptr.vmem [resolvable:$true] %s138
          %144 = dma.hbm_to_vmem [thread:$0]  %s2, 1792, %s139, [#allocation6], 128, 128, 8
        $region16: #{tpu_custom_call.1} parent=11 // pred_fallthru
          _
      $region12: #{tpu_custom_call.1} parent=5 // pred_fallthru
        _
      %p145 = scmp.lt.s32.totalorder %s18, 2
      // Predicated region
      $region17: #{tpu_custom_call.1} parent=5 // pred_check
        %p146 = pneg %p145
      $region18: #{tpu_custom_call.1} parent=5 // pred_check_branch
        %148 = sbr.rel (%p146) target = $region20
      $region19: #{tpu_custom_call.1} parent=5 // pred_region
        // Predicated region
        $region21: #{tpu_custom_call.1} parent=19 // pred_check
          %p149 = pneg %p38
        $region22: #{tpu_custom_call.1} parent=19 // pred_check_branch
          %151 = sbr.rel (%p149) target = $region24
        $region23: #{tpu_custom_call.1} parent=19 // pred_region
          %s152 = sand.u32 %s28, 1
          %s153 = scalar_lea.sflag [#allocation3], %s152
          %s154 = sand.u32 %s28, 1
          %s155 = smul.addr %s154, 16
          %s156 = scalar_lea.vmem [#allocation2], %s155
          %s157 = smul.u32 2, %s18
          %s159 = ssub.s32 256, 256
          %160 = vsyncadd %s153, %s159
          %s161 = smul.addr %s157, 128
          %s162 = scalar_lea.hbm %s0, %s161
          %s163 = sshll.u32 %s156, 4
          %s164 = int_to_ptr.vmem [resolvable:$true] %s163
          %169 = dma.hbm_to_vmem [thread:$0]  %s162, 256, %s164, %s153, 128, 128, 8
        $region24: #{tpu_custom_call.1} parent=19 // pred_fallthru
          _
        // Predicated region
        $region25: #{tpu_custom_call.1} parent=19 // pred_check
          %p170 = pneg %p64
        $region26: #{tpu_custom_call.1} parent=19 // pred_check_branch
          %172 = sbr.rel (%p170) target = $region28
        $region27: #{tpu_custom_call.1} parent=19 // pred_region
          %s173 = sand.u32 %s18, 1
          %s174 = scalar_lea.sflag [#allocation6], %s173
          %s175 = sand.u32 %s54, 1
          %s176 = smul.addr %s175, 16
          %s177 = scalar_lea.vmem [#allocation5], %s176
          %s178 = smul.u32 2, %s18
          %s180 = ssub.s32 256, 256
          %181 = vsyncadd %s174, %s180
          %s182 = smul.addr %s178, 128
          %s183 = scalar_lea.hbm %s1, %s182
          %s184 = sshll.u32 %s177, 4
          %s185 = int_to_ptr.vmem [resolvable:$true] %s184
          %190 = dma.hbm_to_vmem [thread:$0]  %s183, 256, %s185, %s174, 128, 128, 8
        $region28: #{tpu_custom_call.1} parent=19 // pred_fallthru
          _
      $region20: #{tpu_custom_call.1} parent=5 // pred_fallthru
        _
      %p191 = scmp.le.s32.totalorder 1, %s18
      %p192 = scmp.lt.s32.totalorder %s18, 3
      %p193 = pnand %p191, %p192
      %p194 = pneg %p193
      // Predicated region
      $region29: #{tpu_custom_call.1} parent=5 // pred_check
        _
      $region30: #{tpu_custom_call.1} parent=5 // pred_check_branch
        %196 = sbr.rel (%p193) target = $region32
      $region31: #{tpu_custom_call.1} parent=5 // pred_region
        %s197 = ssub.s32 %s18, 1
        %s198 = sand.u32 %s31, 1
        %s199 = scalar_lea.sflag [#allocation3], %s198
        %s200 = sand.u32 %s31, 1
        %s201 = smul.addr %s200, 16
        %s202 = scalar_lea.vmem [#allocation2], %s201
        // Predicated region
        $region33: #{tpu_custom_call.1} parent=31 // pred_check
          %p203 = pneg %p44
        $region34: #{tpu_custom_call.1} parent=31 // pred_check_branch
          %205 = sbr.rel (%p203) target = $region36
        $region35: #{tpu_custom_call.1} parent=31 // pred_region
          %206 = dma.done %s199, 256
        $region36: #{tpu_custom_call.1} parent=31 // pred_fallthru
          _
        %s207 = sand.u32 %s23, 1
        %s208 = scalar_lea.sflag [#allocation6], %s207
        %s209 = sand.u32 %s57, 1
        %s210 = smul.addr %s209, 16
        %s211 = scalar_lea.vmem [#allocation5], %s210
        // Predicated region
        $region37: #{tpu_custom_call.1} parent=31 // pred_check
          %p212 = pneg %p70
        $region38: #{tpu_custom_call.1} parent=31 // pred_check_branch
          %214 = sbr.rel (%p212) target = $region40
        $region39: #{tpu_custom_call.1} parent=31 // pred_region
          %215 = dma.done %s208, 256
        $region40: #{tpu_custom_call.1} parent=31 // pred_fallthru
          _
        // Predicated region
        $region41: #{tpu_custom_call.1} parent=31 // pred_check
          %p216 = pneg %p91
        $region42: #{tpu_custom_call.1} parent=31 // pred_check_branch
          %218 = sbr.rel (%p216) target = $region44
        $region43: #{tpu_custom_call.1} parent=31 // pred_region
          %219 = dma.done [#allocation6], 1792
        $region44: #{tpu_custom_call.1} parent=31 // pred_fallthru
          _
        %s220 = sand.u32 %s31, 1
        %s221 = scalar_lea.sflag [#allocation3], %s220
        %s222 = sand.u32 %s31, 1
        %s223 = smul.addr %s222, 16
        %s224 = scalar_lea.vmem [#allocation2], %s223
        %p225 = pneg %p44
        %p226 = pneg %p41
        %s227 = sand.u32 %s23, 1
        %s228 = scalar_lea.sflag [#allocation6], %s227
        %s229 = sand.u32 %s57, 1
        %s230 = smul.addr %s229, 16
        %s231 = scalar_lea.vmem [#allocation5], %s230
        %p232 = pneg %p70
        %p233 = pneg %p67
        %p234 = pneg %p91
        %p235 = pneg %p88
        %p236 = pneg %p117
        %p237 = pneg %p114
        %s238 = sand.u32 %s104, 1
        %s239 = scalar_lea.sflag [#allocation4], %s238
        %s240 = sand.u32 %s104, 1
        %s241 = smul.addr %s240, 16
        %s242 = scalar_lea.vmem [#allocation8], %s241
        %s243 = smul.u32 2, %s23
        %s244 = smul.u32 2, %s23
        %s245 = smul.u32 2, %s23
        %v246 = vld [vmem:[%s202] sm:$0xff]
        %v247 = vld [vmem:[%s202 + $0x8] sm:$0xff]
        %v248 = vld [vmem:[#allocation7] sm:$0xff]
        %v249 = vld [vmem:[#allocation7 + $0x8] sm:$0xff]
        %v250 = vld [vmem:[#allocation7 + $0x10] sm:$0xff]
        %v251 = vld [vmem:[#allocation7 + $0x18] sm:$0xff]
        %v252 = vld [vmem:[#allocation7 + $0x20] sm:$0xff]
        %v253 = vld [vmem:[#allocation7 + $0x28] sm:$0xff]
        %v254 = vld [vmem:[#allocation7 + $0x30] sm:$0xff]
        %v255 = vld [vmem:[#allocation7 + $0x38] sm:$0xff]
        %v256 = vld [vmem:[#allocation7 + $0x40] sm:$0xff]
        %v257 = vld [vmem:[#allocation7 + $0x48] sm:$0xff]
        %v258 = vld [vmem:[#allocation7 + $0x50] sm:$0xff]
        %v259 = vld [vmem:[#allocation7 + $0x58] sm:$0xff]
        %v260 = vld [vmem:[#allocation7 + $0x60] sm:$0xff]
        %v261 = vld [vmem:[#allocation7 + $0x68] sm:$0xf]
        %vm262 = vcmask 883712
        %v264 = vsel %vm262, %v246, 0
        %v267 = vsel %vm262, %v247, 0
        %vm269 = vcmask 1043456
        %v271 = vsel %vm269, %v261, 0
        %273 = vmatprep.subr.mxu0 0.0
        %274 = vmatpush1.msra.mxu0 0.0
        %275 = vmatprep.subr.mxu0 0.0
        %276 = vmatpush1.msra.mxu0 0.0
        %277 = vmatprep.subr.mxu0 0.0
        %278 = vmatpush1.msra.mxu0 %v271
        %279 = vmatprep.subr.mxu0 0.0
        %280 = vmatpush1.msra.mxu0 %v260
        %281 = vmatprep.subr.mxu0 0.0
        %282 = vmatpush1.msra.mxu0 %v259
        %283 = vmatprep.subr.mxu0 0.0
        %284 = vmatpush1.msra.mxu0 %v258
        %285 = vmatprep.subr.mxu0 0.0
        %286 = vmatpush1.msra.mxu0 %v257
        %287 = vmatprep.subr.mxu0 0.0
        %288 = vmatpush1.msra.mxu0 %v256
        %289 = vmatprep.subr.mxu0 0.0
        %290 = vmatpush1.msra.mxu0 %v255
        %291 = vmatprep.subr.mxu0 0.0
        %292 = vmatpush1.msra.mxu0 %v254
        %293 = vmatprep.subr.mxu0 0.0
        %294 = vmatpush1.msra.mxu0 %v253
        %295 = vmatprep.subr.mxu0 0.0
        %296 = vmatpush1.msra.mxu0 %v252
        %297 = vmatprep.subr.mxu0 0.0
        %298 = vmatpush1.msra.mxu0 %v251
        %299 = vmatprep.subr.mxu0 0.0
        %300 = vmatpush1.msra.mxu0 %v250
        %301 = vmatprep.subr.mxu0 0.0
        %302 = vmatpush1.msra.mxu0 %v249
        %303 = vmatprep.subr.mxu0 0.0
        %304 = vmatpush1.msra.mxu0 %v248
        %305 = vmatprep.subr.mxu0 0.0
        %306 = vmatpush2.msra.mxu0 0.0
        %307 = vmatprep.subr.mxu0 0.0
        %308 = vmatpush2.msra.mxu0 0.0
        %309 = vmatprep.subr.mxu0 0.0
        %310 = vmatpush2.msra.mxu0 0.0
        %311 = vmatprep.subr.mxu0 0.0
        %312 = vmatpush2.msra.mxu0 0.0
        %313 = vmatprep.subr.mxu0 0.0
        %314 = vmatpush2.msra.mxu0 0.0
        %315 = vmatprep.subr.mxu0 0.0
        %316 = vmatpush2.msra.mxu0 0.0
        %317 = vmatprep.subr.mxu0 0.0
        %318 = vmatpush2.msra.mxu0 0.0
        %319 = vmatprep.subr.mxu0 0.0
        %320 = vmatpush2.msra.mxu0 0.0
        %321 = vmatprep.subr.mxu0 0.0
        %322 = vmatpush2.msra.mxu0 0.0
        %323 = vmatprep.subr.mxu0 0.0
        %324 = vmatpush2.msra.mxu0 0.0
        %325 = vmatprep.subr.mxu0 0.0
        %326 = vmatpush2.msra.mxu0 0.0
        %327 = vmatprep.subr.mxu0 0.0
        %328 = vmatpush2.msra.mxu0 0.0
        %329 = vmatprep.subr.mxu0 0.0
        %330 = vmatpush2.msra.mxu0 0.0
        %331 = vmatprep.subr.mxu0 0.0
        %332 = vmatpush2.msra.mxu0 0.0
        %333 = vmatprep.subr.mxu0 0.0
        %334 = vmatpush2.msra.mxu0 0.0
        %335 = vmatprep.subr.mxu0 0.0
        %336 = vmatpush2.msra.mxu0 0.0
        %337 = vmatprep.mubr.f32.mxu0 0.0
        %338 = vmatmul.mubr.f32.gmra.mxu0 %v264
        %v339 = vpop.f32.mrf.mxu0
        %v340 = vadd.f32 0.0, %v339
        %v341 = vpop.f32.mrf.mxu0
        %342 = vmatprep.mubr.f32.mxu0 0.0
        %343 = vmatmul.mubr.f32.gmra.mxu0 %v267
        %v344 = vpop.f32.mrf.mxu0
        %v345 = vadd.f32 0.0, %v344
        %v346 = vpop.f32.mrf.mxu0
        %347 = vdwg.mxu0
        %v348 = vxor.u32 %v340, 2147483648
        %v349 = vxor.u32 %v345, 2147483648
        %v350 = vmul.f32 %v348, 1.442695
        %v351 = vpow.pop %v350
        %v352 = vmul.f32 %v349, 1.442695
        %v353 = vpow.pop %v352
        %v354 = vadd.f32 %v351, 1.0
        %v355 = vadd.f32 %v353, 1.0
        %v356 = vrcp.pop %v354
        %v357 = vmul.f32 1.0, %v356
        %v358 = vrcp.pop %v355
        %v359 = vmul.f32 1.0, %v358
        %v360 = vtanh.pop %v340
        %v361 = vtanh.pop %v345
        %v362 = vld [vmem:[%s211] sm:$0xff]
        %v363 = vld [vmem:[%s211 + $0x8] sm:$0xff]
        %366 = vrot.lane.b32.xlu0 %v362, 32
        %v367 = vpop.permute.xlu0 %366
        %368 = vrot.lane.b32.xlu0 %v363, 32
        %v369 = vpop.permute.xlu0 %368
        %v372 = vmul.f32 %v357, %v367
        %v373 = vmul.f32 %v359, %v369
        %376 = vrot.lane.b32.xlu0 %v360, 32
        %v377 = vpop.permute.xlu0 %376
        %378 = vrot.lane.b32.xlu0 %v361, 32
        %v379 = vpop.permute.xlu0 %378
        %v382 = vmul.f32 %v357, %v377
        %v383 = vmul.f32 %v359, %v379
        %386 = vrot.lane.b32.xlu0 %v382, 32
        %v387 = vpop.permute.xlu0 %386
        %388 = vrot.lane.b32.xlu0 %v383, 32
        %v389 = vpop.permute.xlu0 %388
        %v392 = vadd.f32 %v372, %v387
        %v393 = vadd.f32 %v373, %v389
        %v394 = vtanh.pop %v392
        %v395 = vtanh.pop %v393
        %398 = vrot.lane.b32.xlu0 %v394, 32
        %v399 = vpop.permute.xlu0 %398
        %400 = vrot.lane.b32.xlu0 %v395, 32
        %v401 = vpop.permute.xlu0 %400
        %v404 = vmul.f32 %v357, %v399
        %v405 = vmul.f32 %v359, %v401
        %408 = vrot.lane.b32.xlu0 %v404, 64
        %v409 = vpop.permute.xlu0 %408
        %410 = vrot.lane.b32.xlu0 %v405, 64
        %v411 = vpop.permute.xlu0 %410
        %vm414 = vcmask 261120
        %v415 = vsel %vm414, %v409, %v392
        %v416 = vsel %vm414, %v411, %v393
        %vm417 = vcmask 523264
        %418 = vst.msk [vmem:[%s242] sm:$0xff] %vm417, %v415
        %419 = vst.msk [vmem:[%s242 + $0x8] sm:$0xff] %vm417, %v416
        %s420 = sand.u32 %s104, 1
        %s421 = scalar_lea.sflag [#allocation4], %s420
        %s422 = sand.u32 %s104, 1
        %s423 = smul.addr %s422, 16
        %s424 = scalar_lea.vmem [#allocation8], %s423
        // Predicated region
        $region45: #{tpu_custom_call.1} parent=31 // pred_check
          %p425 = pneg %p114
        $region46: #{tpu_custom_call.1} parent=31 // pred_check_branch
          %427 = sbr.rel (%p425) target = $region48
        $region47: #{tpu_custom_call.1} parent=31 // pred_region
          %s428 = smul.u32 2, %s23
          %s430 = ssub.s32 256, 256
          %431 = vsyncadd %s421, %s430
          %s432 = smul.addr %s428, 128
          %s433 = scalar_lea.hbm %s3, %s432
          %s434 = sshll.u32 %s424, 4
          %s435 = int_to_ptr.vmem [resolvable:$true] %s434
          %440 = dma.vmem_to_hbm [thread:$0]  %s435, 256, %s433, %s421, 128, 128, 8
        $region48: #{tpu_custom_call.1} parent=31 // pred_fallthru
          _
      $region32: #{tpu_custom_call.1} parent=5 // pred_fallthru
        _
      %p441 = scmp.le.s32.totalorder 2, %s18
      // Predicated region
      $region49: #{tpu_custom_call.1} parent=5 // pred_check
        %p442 = pneg %p441
      $region50: #{tpu_custom_call.1} parent=5 // pred_check_branch
        %444 = sbr.rel (%p442) target = $region52
      $region51: #{tpu_custom_call.1} parent=5 // pred_region
        %s445 = ssub.s32 %s18, 2
        // Predicated region
        $region53: #{tpu_custom_call.1} parent=51 // pred_check
          %p446 = pneg %p120
        $region54: #{tpu_custom_call.1} parent=51 // pred_check_branch
          %448 = sbr.rel (%p446) target = $region56
        $region55: #{tpu_custom_call.1} parent=51 // pred_region
          %s449 = sand.u32 %s105, 1
          %s450 = scalar_lea.sflag [#allocation4], %s449
          %s451 = sand.u32 %s105, 1
          %s452 = smul.addr %s451, 16
          %s453 = scalar_lea.vmem [#allocation8], %s452
          %454 = dma.done %s450, 256
        $region56: #{tpu_custom_call.1} parent=51 // pred_fallthru
          _
      $region52: #{tpu_custom_call.1} parent=5 // pred_fallthru
        _
    $region6: #{tpu_custom_call.1} parent=1 // loop_footer
      %s22 = sadd.s32 1, %s18
    $region7: #{tpu_custom_call.1} parent=1 // loop_footer_branch
      %17 = sbr.rel target = $region3
    $region8: #{tpu_custom_call.1} parent=1 // loop_exit
      _
    %455 = vsyncpa [#allocation3], 1
    %s456 = scalar_lea.sflag [#allocation3], 1
    %457 = vsyncpa %s456, 1
    %458 = vsyncpa [#allocation6], 1
    %s459 = scalar_lea.sflag [#allocation6], 1
    %460 = vsyncpa %s459, 1
    %461 = vsyncpa [#allocation4], 1
    %s462 = scalar_lea.sflag [#allocation4], 1
    %463 = vsyncpa %s462, 1

</llo_original>
